<compile_context>
chip_gen: v7x
topology: tpu7x:2x2x1
jax: 0.10.0
libtpu: 0.0.40
codegen_flags: <defaults>
</compile_context>

<pallas_src>
import jax
import jax.numpy as jnp
from jax.experimental import pallas as pl
from jax.experimental.pallas import tpu as pltpu

IN_F = 28 * 28     # 784
H1 = 128
H2 = 64
H2_PAD = 128       # fc2 output padded 64 -> 128 lanes (exact: pad cols are zero)
OUT_F = 10
OUT_PAD = 16       # fc3 output padded 10 -> 16 lanes (block last dim == array dim)


def mlp_kernel(x_ref, w1_ref, b1_ref, w2_ref, b2_ref, w3_ref, b3_ref, o_ref):
    # In-kernel bf16 cast of the streamed f32 activations (VPU slack, halves
    # nothing in HBM -- x only ever crosses HBM once, as f32).
    x = x_ref[...].astype(jnp.bfloat16)
    # fc1 + ReLU  (bf16 MXU inputs, f32 accumulation)
    h1 = jnp.dot(x, w1_ref[...], preferred_element_type=jnp.float32)
    h1 = jnp.maximum(h1 + b1_ref[...], 0.0)
    # fc2 + ReLU  (N padded to 128 lanes; pad columns stay exactly 0)
    h2 = jnp.dot(h1.astype(jnp.bfloat16), w2_ref[...],
                 preferred_element_type=jnp.float32)
    h2 = jnp.maximum(h2 + b2_ref[...], 0.0)
    # fc3 (no activation; padded rows/cols of w3 are zero so they contribute nothing)
    out = jnp.dot(h2.astype(jnp.bfloat16), w3_ref[...],
                  preferred_element_type=jnp.float32)
    o_ref[...] = (out + b3_ref[...]).astype(o_ref.dtype)


def pack_params(params_f32):
    """Pad feature dims (fc2->128, fc3->16 lanes); weights -> bf16, biases stay f32."""
    w1, b1, w2, b2, w3, b3 = params_f32
    pad_cols = lambda a, n: jnp.pad(a, ((0, 0), (0, n - a.shape[1])))
    pad_rows = lambda a, n: jnp.pad(a, ((0, n - a.shape[0]), (0, 0)))
    w2p = pad_cols(w2, H2_PAD)                     # (128, 128)
    b2p = pad_cols(b2, H2_PAD)                     # (1, 128)
    w3p = pad_cols(pad_rows(w3, H2_PAD), OUT_PAD)  # (128, 16)
    b3p = pad_cols(b3, OUT_PAD)                    # (1, 16)
    return (w1.astype(jnp.bfloat16), b1,
            w2p.astype(jnp.bfloat16), b2p,
            w3p.astype(jnp.bfloat16), b3p)


def _round_up(n, m):
    return ((n + m - 1) // m) * m


def mnist_classifier_forward(x, packed_params, *, tile_b=1024):
    """x: (B, 1, 28, 28) or (B, 784) float32.  Returns (B, 10) f32 logits."""
    w1, b1, w2, b2, w3, b3 = packed_params
    x2d = x.reshape(-1, IN_F)          # free reshape; stays f32, no copy/cast pass
    B = x2d.shape[0]

    # Tile selection: don't overshoot tiny batches (keep 8-row sublane alignment);
    # for mid/large batches clamp so there are >= 2 tiles (both v7x TensorCores).
    tile_b = max(8, min(tile_b, _round_up(B, 8)))
    if B >= 512:
        tile_b = min(tile_b, max(256, _round_up(pl.cdiv(B, 2), 256)))
    n_tiles = pl.cdiv(B, tile_b)       # last block may be partial -- no jnp.pad of x

    def const_spec(arr):
        return pl.BlockSpec(arr.shape, lambda i: (0,) * arr.ndim)

    # VMEM budget: double-buffered f32 x tile + f32 out tile + resident weights.
    x_tile_bytes = tile_b * IN_F * 4
    out_tile_bytes = tile_b * OUT_PAD * 4
    weight_bytes = sum(int(a.size) * a.dtype.itemsize for a in packed_params)
    vmem_limit = 2 * (x_tile_bytes + out_tile_bytes + weight_bytes) + (4 << 20)
    vmem_limit = int(min(max(vmem_limit, 8 << 20), 64 << 20))

    out = pl.pallas_call(
        mlp_kernel,
        out_shape=jax.ShapeDtypeStruct((B, OUT_PAD), jnp.float32),
        grid=(n_tiles,),
        in_specs=[
            pl.BlockSpec((tile_b, IN_F), lambda i: (i, 0)),   # streamed f32 activation
            const_spec(w1), const_spec(b1),                   # VMEM-resident params
            const_spec(w2), const_spec(b2),
            const_spec(w3), const_spec(b3),
        ],
        out_specs=pl.BlockSpec((tile_b, OUT_PAD), lambda i: (i, 0)),
        compiler_params=pltpu.CompilerParams(
            dimension_semantics=("parallel",),   # batch tiles independent (2 TCs on v7x)
            vmem_limit_bytes=vmem_limit,
        ),
    )(x2d, w1, b1, w2, b2, w3, b3)

    # Padded logit columns 10..15 are exactly 0 (zero weight/bias pads); slice them
    # off.  With the 16-wide slab this re-reads only 64 B/row.
    return out[:, :OUT_F]


def init_params(key):
    """Deterministic init mimicking PyTorch nn.Linear default U(-1/sqrt(fan_in), +).
    Weights are stored transposed vs PyTorch, i.e. (in_features, out_features)."""
    dims = [(IN_F, H1), (H1, H2), (H2, OUT_F)]
    params = []
    for i, (fan_in, fan_out) in enumerate(dims):
        kw, kb = jax.random.split(jax.random.fold_in(key, i))
        bound = 1.0 / jnp.sqrt(fan_in)
        w = jax.random.uniform(kw, (fan_in, fan_out), jnp.float32, -bound, bound)
        b = jax.random.uniform(kb, (1, fan_out), jnp.float32, -bound, bound)
        params += [w, b]
    return tuple(params)


def _reference_forward(x, params_f32):
    """Pure-JAX reference with the same dtype semantics (bf16 inputs, f32 accumulate).
    Note: bf16 matmul inputs are an intentional numerics choice (~3 sig. digits)."""
    w1, b1, w2, b2, w3, b3 = params_f32
    h = x.reshape(-1, IN_F).astype(jnp.bfloat16)
    h = jnp.maximum(jnp.dot(h, w1.astype(jnp.bfloat16),
                            preferred_element_type=jnp.float32) + b1, 0.0)
    h = jnp.maximum(jnp.dot(h.astype(jnp.bfloat16), w2.astype(jnp.bfloat16),
                            preferred_element_type=jnp.float32) + b2, 0.0)
    return jnp.dot(h.astype(jnp.bfloat16), w3.astype(jnp.bfloat16),
                   preferred_element_type=jnp.float32) + b3


if __name__ == "__main__":
    key = jax.random.PRNGKey(0)
    k_params, k_x = jax.random.split(key)

    params_f32 = init_params(k_params)
    packed = pack_params(params_f32)

    # Small batch of MNIST-shaped inputs (NCHW like PyTorch): (2, 1, 28, 28)
    x = jax.random.normal(k_x, (2, 1, 28, 28), jnp.float32)

    logits = mnist_classifier_forward(x, packed)
    logits = jax.block_until_ready(logits)

    ref = _reference_forward(x, params_f32)
    assert logits.shape == (2, 10), logits.shape
    assert jnp.allclose(logits, ref, atol=1e-2, rtol=1e-2), "mismatch vs reference"

    print("KERNEL_OK")
</pallas_src>

<mosaic_0001>
module attributes {stable_mosaic.version = 11 : i64} {
  func.func @mlp_kernel(%arg0: i32, %arg1: memref<8x784xf32, #tpu.memory_space<vmem>>, %arg2: memref<784x128xbf16, #tpu.memory_space<vmem>>, %arg3: memref<1x128xf32, #tpu.memory_space<vmem>>, %arg4: memref<128x128xbf16, #tpu.memory_space<vmem>>, %arg5: memref<1x128xf32, #tpu.memory_space<vmem>>, %arg6: memref<128x16xbf16, #tpu.memory_space<vmem>>, %arg7: memref<1x16xf32, #tpu.memory_space<vmem>>, %arg8: memref<8x16xf32, #tpu.memory_space<vmem>>) attributes {dimension_semantics = [#tpu.dimension_semantics<parallel>], iteration_bounds = array<i64: 1>, scalar_prefetch = 0 : i64, scratch_operands = 0 : i64, tpu.core_type = #tpu.core_type<tc>, window_params = [{transform_indices = @transform_0, window_bounds = array<i64: 8, 784>}, {pipeline_mode = #tpu.pipeline_mode<synchronous>, transform_indices = @transform_1, window_bounds = array<i64: 784, 128>}, {pipeline_mode = #tpu.pipeline_mode<synchronous>, transform_indices = @transform_2, window_bounds = array<i64: 1, 128>}, {pipeline_mode = #tpu.pipeline_mode<synchronous>, transform_indices = @transform_3, window_bounds = array<i64: 128, 128>}, {pipeline_mode = #tpu.pipeline_mode<synchronous>, transform_indices = @transform_4, window_bounds = array<i64: 1, 128>}, {pipeline_mode = #tpu.pipeline_mode<synchronous>, transform_indices = @transform_5, window_bounds = array<i64: 128, 16>}, {pipeline_mode = #tpu.pipeline_mode<synchronous>, transform_indices = @transform_6, window_bounds = array<i64: 1, 16>}, {transform_indices = @transform_7, window_bounds = array<i64: 8, 16>}]} {
    %c0 = arith.constant 0 : index
    %c0_0 = arith.constant 0 : index
    %0 = vector.load %arg1[%c0, %c0_0] : memref<8x784xf32, #tpu.memory_space<vmem>>, vector<8x784xf32>
    %1 = arith.truncf %0 : vector<8x784xf32> to vector<8x784xbf16>
    %c0_1 = arith.constant 0 : index
    %c0_2 = arith.constant 0 : index
    %2 = vector.load %arg2[%c0_1, %c0_2] : memref<784x128xbf16, #tpu.memory_space<vmem>>, vector<784x128xbf16>
    %cst = arith.constant dense<0.000000e+00> : vector<8x128xf32>
    %3 = tpu.matmul %1, %2, %cst {dimension_numbers = #tpu.dot_dimension_numbers<[1], [0], [0], [1], [0, 0, 1, 1], [], []>} : vector<8x784xbf16>, vector<784x128xbf16>, vector<8x128xf32> -> vector<8x128xf32>
    %c0_3 = arith.constant 0 : index
    %c0_4 = arith.constant 0 : index
    %4 = vector.load %arg3[%c0_3, %c0_4] : memref<1x128xf32, #tpu.memory_space<vmem>>, vector<1x128xf32>
    %5 = vector.broadcast %4 : vector<1x128xf32> to vector<8x128xf32>
    %6 = arith.addf %3, %5 : vector<8x128xf32>
    %cst_5 = arith.constant 0.000000e+00 : f32
    %7 = vector.broadcast %cst_5 : f32 to vector<8x128xf32>
    %8 = arith.maximumf %6, %7 : vector<8x128xf32>
    %9 = arith.truncf %8 : vector<8x128xf32> to vector<8x128xbf16>
    %c0_6 = arith.constant 0 : index
    %c0_7 = arith.constant 0 : index
    %10 = vector.load %arg4[%c0_6, %c0_7] : memref<128x128xbf16, #tpu.memory_space<vmem>>, vector<128x128xbf16>
    %cst_8 = arith.constant dense<0.000000e+00> : vector<8x128xf32>
    %11 = tpu.matmul %9, %10, %cst_8 {dimension_numbers = #tpu.dot_dimension_numbers<[1], [0], [0], [1], [0, 0, 1, 1], [], []>} : vector<8x128xbf16>, vector<128x128xbf16>, vector<8x128xf32> -> vector<8x128xf32>
    %c0_9 = arith.constant 0 : index
    %c0_10 = arith.constant 0 : index
    %12 = vector.load %arg5[%c0_9, %c0_10] : memref<1x128xf32, #tpu.memory_space<vmem>>, vector<1x128xf32>
    %13 = vector.broadcast %12 : vector<1x128xf32> to vector<8x128xf32>
    %14 = arith.addf %11, %13 : vector<8x128xf32>
    %cst_11 = arith.constant 0.000000e+00 : f32
    %15 = vector.broadcast %cst_11 : f32 to vector<8x128xf32>
    %16 = arith.maximumf %14, %15 : vector<8x128xf32>
    %17 = arith.truncf %16 : vector<8x128xf32> to vector<8x128xbf16>
    %c0_12 = arith.constant 0 : index
    %c0_13 = arith.constant 0 : index
    %18 = vector.load %arg6[%c0_12, %c0_13] : memref<128x16xbf16, #tpu.memory_space<vmem>>, vector<128x16xbf16>
    %cst_14 = arith.constant dense<0.000000e+00> : vector<8x16xf32>
    %19 = tpu.matmul %17, %18, %cst_14 {dimension_numbers = #tpu.dot_dimension_numbers<[1], [0], [0], [1], [0, 0, 1, 1], [], []>} : vector<8x128xbf16>, vector<128x16xbf16>, vector<8x16xf32> -> vector<8x16xf32>
    %c0_15 = arith.constant 0 : index
    %c0_16 = arith.constant 0 : index
    %20 = vector.load %arg7[%c0_15, %c0_16] : memref<1x16xf32, #tpu.memory_space<vmem>>, vector<1x16xf32>
    %21 = vector.broadcast %20 : vector<1x16xf32> to vector<8x16xf32>
    %22 = arith.addf %19, %21 : vector<8x16xf32>
    %c0_17 = arith.constant 0 : index
    %c0_18 = arith.constant 0 : index
    %23 = vector.load %arg8[%c0_17, %c0_18] : memref<8x16xf32, #tpu.memory_space<vmem>>, vector<8x16xf32>
    tpu.vector_store %arg8[%c0_17, %c0_18], %22 {strides = array<i32>} : memref<8x16xf32, #tpu.memory_space<vmem>>, vector<8x16xf32>,
    return
  }
  func.func @transform_0(%arg0: i32) -> (i32, i32) {
    %c0_i32 = arith.constant 0 : i32
    %c0_i32_0 = arith.constant 0 : i32
    return %arg0, %c0_i32 : i32, i32
  }
  func.func @transform_1(%arg0: i32) -> (i32, i32) {
    %c0_i32 = arith.constant 0 : i32
    %c0_i32_0 = arith.constant 0 : i32
    %c0_i32_1 = arith.constant 0 : i32
    return %c0_i32, %c0_i32_0 : i32, i32
  }
  func.func @transform_2(%arg0: i32) -> (i32, i32) {
    %c0_i32 = arith.constant 0 : i32
    %c0_i32_0 = arith.constant 0 : i32
    %c0_i32_1 = arith.constant 0 : i32
    return %c0_i32, %c0_i32_0 : i32, i32
  }
  func.func @transform_3(%arg0: i32) -> (i32, i32) {
    %c0_i32 = arith.constant 0 : i32
    %c0_i32_0 = arith.constant 0 : i32
    %c0_i32_1 = arith.constant 0 : i32
    return %c0_i32, %c0_i32_0 : i32, i32
  }
  func.func @transform_4(%arg0: i32) -> (i32, i32) {
    %c0_i32 = arith.constant 0 : i32
    %c0_i32_0 = arith.constant 0 : i32
    %c0_i32_1 = arith.constant 0 : i32
    return %c0_i32, %c0_i32_0 : i32, i32
  }
  func.func @transform_5(%arg0: i32) -> (i32, i32) {
    %c0_i32 = arith.constant 0 : i32
    %c0_i32_0 = arith.constant 0 : i32
    %c0_i32_1 = arith.constant 0 : i32
    return %c0_i32, %c0_i32_0 : i32, i32
  }
  func.func @transform_6(%arg0: i32) -> (i32, i32) {
    %c0_i32 = arith.constant 0 : i32
    %c0_i32_0 = arith.constant 0 : i32
    %c0_i32_1 = arith.constant 0 : i32
    return %c0_i32, %c0_i32_0 : i32, i32
  }
  func.func @transform_7(%arg0: i32) -> (i32, i32) {
    %c0_i32 = arith.constant 0 : i32
    %c0_i32_0 = arith.constant 0 : i32
    return %arg0, %c0_i32 : i32, i32
  }
}

</mosaic_0001>

<llo_original>
// kernel: tpu_custom_call.1
$region0: #{tpu_custom_call.1}
  #allocation0 [shape = 'u32[]', space=smem, size = 0x4, offset = 0x4, fixed_abs, tag = 'smem constant byte address 0x4 - core index']
  #allocation1 [shape = 'u32[144,128]{1,0:T(1,128)}', space=vmem, size = 0x12000, scoped, tag = 'internal scratch']
  %s0 = inlined_call_operand.vmem [shape: f32[2,784], index: 0, kind: input, shape index: {}]
  %s1 = inlined_call_operand.hbm [shape: bf16[784,128], index: 1, kind: input, shape index: {}]
  %s2 = inlined_call_operand.vmem [shape: f32[1,128], index: 2, kind: input, shape index: {}]
  %s3 = inlined_call_operand.vmem [shape: bf16[128,128], index: 3, kind: input, shape index: {}]
  %s4 = inlined_call_operand.hbm [shape: f32[1,128], index: 4, kind: input, shape index: {}]
  %s5 = inlined_call_operand.vmem [shape: bf16[128,16], index: 5, kind: input, shape index: {}]
  %s6 = inlined_call_operand.vmem [shape: f32[1,16], index: 6, kind: input, shape index: {}]
  %s7 = inlined_call_operand.hbm [shape: f32[2,16], index: 7, kind: output, shape index: {}]
  %s8 = sld [smem:[#allocation0]]
  $region46: #{tpu_custom_call.1} parent=0
    _
  %s10 = ssub.s32 1, %s8
  %s11 = scalar_select 0, %s10, %s8
  $region1: #{tpu_custom_call.1} parent=0
    #allocation2 [shape = 'u8[200704]{0}', space=vmem, size = 0x31000, scoped, tag = 'input window, operand 1, single buffered']
    #allocation3 [shape = 's32[1]{0}', space=sflag, size = 0x4, scoped, tag = 'scoped memory for tpu_custom_call.1']
    #allocation4 [shape = 's32[1]{0}', space=sflag, size = 0x4, scoped, tag = 'scoped memory for tpu_custom_call.1']
    #allocation5 [shape = 'u8[512]{0}', space=vmem, size = 0x400, scoped, tag = 'input window, operand 4, single buffered']
    #allocation6 [shape = 's32[1]{0}', space=sflag, size = 0x4, scoped, tag = 'scoped memory for tpu_custom_call.1']
    #allocation7 [shape = 'u8[4096]{0}', space=vmem, size = 0x1000, scoped, tag = 'output window, operand 0, single buffered']
    %12 = vsyncpa [#allocation3], 0
    %13 = vsyncpa [#allocation6], 0
    %14 = vsyncpa [#allocation4], 0
    // Predicated region
    $region2: #{tpu_custom_call.1} parent=1 // pred_check
      _
    $region3: #{tpu_custom_call.1} parent=1 // pred_check_branch
      %16 = sbr.rel (0) target = $region5
    $region4: #{tpu_custom_call.1} parent=1 // pred_region
      _
    $region5: #{tpu_custom_call.1} parent=1 // pred_fallthru
      _
    // Predicated region
    $region6: #{tpu_custom_call.1} parent=1 // pred_check
      _
    $region7: #{tpu_custom_call.1} parent=1 // pred_check_branch
      %18 = sbr.rel (0) target = $region9
    $region8: #{tpu_custom_call.1} parent=1 // pred_region
      %s20 = ssub.s32 6272, 6272
      %21 = vsyncadd [#allocation3], %s20
      %s22 = sshll.u32 [#allocation2], 4
      %s23 = int_to_ptr.vmem [resolvable:$true] %s22
      %28 = dma.hbm_to_vmem [thread:$0]  %s1, 6272, %s23, [#allocation3], 64, 64, 4
    $region9: #{tpu_custom_call.1} parent=1 // pred_fallthru
      _
    // Predicated region
    $region10: #{tpu_custom_call.1} parent=1 // pred_check
      _
    $region11: #{tpu_custom_call.1} parent=1 // pred_check_branch
      %30 = sbr.rel (0) target = $region13
    $region12: #{tpu_custom_call.1} parent=1 // pred_region
      _
    $region13: #{tpu_custom_call.1} parent=1 // pred_fallthru
      _
    // Predicated region
    $region14: #{tpu_custom_call.1} parent=1 // pred_check
      _
    $region15: #{tpu_custom_call.1} parent=1 // pred_check_branch
      %32 = sbr.rel (0) target = $region17
    $region16: #{tpu_custom_call.1} parent=1 // pred_region
      _
    $region17: #{tpu_custom_call.1} parent=1 // pred_fallthru
      _
    // Predicated region
    $region18: #{tpu_custom_call.1} parent=1 // pred_check
      _
    $region19: #{tpu_custom_call.1} parent=1 // pred_check_branch
      %34 = sbr.rel (0) target = $region21
    $region20: #{tpu_custom_call.1} parent=1 // pred_region
      %s36 = ssub.s32 16, 16
      %37 = vsyncadd [#allocation6], %s36
      %s39 = sshll.u32 [#allocation5], 4
      %s40 = int_to_ptr.vmem [resolvable:$true] %s39
      %42 = dma.hbm_to_vmem [thread:$0]  %s4, 16, %s40, [#allocation6]
    $region21: #{tpu_custom_call.1} parent=1 // pred_fallthru
      _
    // Predicated region
    $region22: #{tpu_custom_call.1} parent=1 // pred_check
      _
    $region23: #{tpu_custom_call.1} parent=1 // pred_check_branch
      %44 = sbr.rel (0) target = $region25
    $region24: #{tpu_custom_call.1} parent=1 // pred_region
      _
    $region25: #{tpu_custom_call.1} parent=1 // pred_fallthru
      _
    // Predicated region
    $region26: #{tpu_custom_call.1} parent=1 // pred_check
      _
    $region27: #{tpu_custom_call.1} parent=1 // pred_check_branch
      %46 = sbr.rel (0) target = $region29
    $region28: #{tpu_custom_call.1} parent=1 // pred_region
      _
    $region29: #{tpu_custom_call.1} parent=1 // pred_fallthru
      _
    // Predicated region
    $region30: #{tpu_custom_call.1} parent=1 // pred_check
      _
    $region31: #{tpu_custom_call.1} parent=1 // pred_check_branch
      %48 = sbr.rel (0) target = $region33
    $region32: #{tpu_custom_call.1} parent=1 // pred_region
      %49 = dma.done [#allocation3], 6272
    $region33: #{tpu_custom_call.1} parent=1 // pred_fallthru
      _
    // Predicated region
    $region34: #{tpu_custom_call.1} parent=1 // pred_check
      _
    $region35: #{tpu_custom_call.1} parent=1 // pred_check_branch
      %51 = sbr.rel (0) target = $region37
    $region36: #{tpu_custom_call.1} parent=1 // pred_region
      %52 = dma.done [#allocation6], 16
    $region37: #{tpu_custom_call.1} parent=1 // pred_fallthru
      _
    %v54 = vld [vmem:[%s0] sm:$0xff]
    %v55 = vld [vmem:[%s0 + $0x8] sm:$0x3f]
    %v56 = vld [vmem:[%s0 + $0xe] sm:$0xff]
    %v57 = vld [vmem:[%s0 + $0x16] sm:$0x3f]
    %v58 = vld [vmem:[%s0 + $0x1c] sm:$0xff]
    %v59 = vld [vmem:[%s0 + $0x24] sm:$0x3f]
    %v60 = vld [vmem:[%s0 + $0x2a] sm:$0xff]
    %v61 = vld [vmem:[%s0 + $0x32] sm:$0x3f]
    %v70 = vcombine.low %v54, %v56
    %v71 = vcombine.high %v54, %v56
    %v72 = vcombine.low %v58, %v60
    %v73 = vcombine.high %v58, %v60
    %v75 = vunpack.c.l.s4 1983009808
    %v76 = vunpack.c.0.s8 %v75
    %v77 = vlaneseq
    %v78 = vshrl.u32 %v77, 7
    %v79 = vsub.s32 %v76, %v78
    %v80 = vrot.slane %v70, %v79
    %v82 = vunpack.c.l.s4 1983009808
    %v83 = vunpack.c.0.s8 %v82
    %v84 = vlaneseq
    %v85 = vshrl.u32 %v84, 7
    %v86 = vsub.s32 %v83, %v85
    %v87 = vrot.slane %v71, %v86
    %v89 = vunpack.c.l.s4 1983009808
    %v90 = vunpack.c.0.s8 %v89
    %v91 = vlaneseq
    %v92 = vshrl.u32 %v91, 7
    %v93 = vsub.s32 %v90, %v92
    %v94 = vrot.slane %v72, %v93
    %v96 = vunpack.c.l.s4 1983009808
    %v97 = vunpack.c.0.s8 %v96
    %v98 = vlaneseq
    %v99 = vshrl.u32 %v98, 7
    %v100 = vsub.s32 %v97, %v99
    %v101 = vrot.slane %v73, %v100
    %v102 = vcombine.low %v80, %v94
    %v103 = vcombine.high %v80, %v94
    %v104 = vcombine.low %v87, %v101
    %v105 = vcombine.high %v87, %v101
    %v106 = vcombine.low %v55, %v57
    %v107 = vcombine.high %v55, %v57
    %v108 = vcombine.low %v59, %v61
    %v109 = vcombine.high %v59, %v61
    %v111 = vunpack.c.l.s4 1983009808
    %v112 = vunpack.c.0.s8 %v111
    %v113 = vlaneseq
    %v114 = vshrl.u32 %v113, 7
    %v115 = vsub.s32 %v112, %v114
    %v116 = vrot.slane %v106, %v115
    %v118 = vunpack.c.l.s4 1983009808
    %v119 = vunpack.c.0.s8 %v118
    %v120 = vlaneseq
    %v121 = vshrl.u32 %v120, 7
    %v122 = vsub.s32 %v119, %v121
    %v123 = vrot.slane %v107, %v122
    %v125 = vunpack.c.l.s4 1983009808
    %v126 = vunpack.c.0.s8 %v125
    %v127 = vlaneseq
    %v128 = vshrl.u32 %v127, 7
    %v129 = vsub.s32 %v126, %v128
    %v130 = vrot.slane %v108, %v129
    %v132 = vunpack.c.l.s4 1983009808
    %v133 = vunpack.c.0.s8 %v132
    %v134 = vlaneseq
    %v135 = vshrl.u32 %v134, 7
    %v136 = vsub.s32 %v133, %v135
    %v137 = vrot.slane %v109, %v136
    %v138 = vcombine.low %v116, %v130
    %v139 = vcombine.high %v116, %v130
    %v140 = vcombine.low %v123, %v137
    %v148 = vpack.c.bf16 %v102, %v102
    %v149 = vpack.c.bf16 %v103, %v103
    %v150 = vpack.c.bf16 %v104, %v104
    %v151 = vpack.c.bf16 %v105, %v105
    %v152 = vpack.c.bf16 %v138, %v138
    %v153 = vpack.c.bf16 %v139, %v139
    %v154 = vpack.c.bf16 %v140, %v140
    %v155 = vld [vmem:[#allocation2] sm:$0xf]
    %v156 = vld [vmem:[#allocation2 + $0x4] sm:$0xf]
    %v157 = vld [vmem:[#allocation2 + $0x8] sm:$0xf]
    %v158 = vld [vmem:[#allocation2 + $0xc] sm:$0xf]
    %v159 = vld [vmem:[#allocation2 + $0x10] sm:$0xf]
    %v160 = vld [vmem:[#allocation2 + $0x14] sm:$0xf]
    %v161 = vld [vmem:[#allocation2 + $0x18] sm:$0xf]
    %v162 = vld [vmem:[#allocation2 + $0x1c] sm:$0xf]
    %v163 = vld [vmem:[#allocation2 + $0x20] sm:$0xf]
    %v164 = vld [vmem:[#allocation2 + $0x24] sm:$0xf]
    %v165 = vld [vmem:[#allocation2 + $0x28] sm:$0xf]
    %v166 = vld [vmem:[#allocation2 + $0x2c] sm:$0xf]
    %v167 = vld [vmem:[#allocation2 + $0x30] sm:$0xf]
    %v168 = vld [vmem:[#allocation2 + $0x34] sm:$0xf]
    %v169 = vld [vmem:[#allocation2 + $0x38] sm:$0xf]
    %v170 = vld [vmem:[#allocation2 + $0x3c] sm:$0xf]
    %v171 = vld [vmem:[#allocation2 + $0x40] sm:$0xf]
    %v172 = vld [vmem:[#allocation2 + $0x44] sm:$0xf]
    %v173 = vld [vmem:[#allocation2 + $0x48] sm:$0xf]
    %v174 = vld [vmem:[#allocation2 + $0x4c] sm:$0xf]
    %v175 = vld [vmem:[#allocation2 + $0x50] sm:$0xf]
    %v176 = vld [vmem:[#allocation2 + $0x54] sm:$0xf]
    %v177 = vld [vmem:[#allocation2 + $0x58] sm:$0xf]
    %v178 = vld [vmem:[#allocation2 + $0x5c] sm:$0xf]
    %v179 = vld [vmem:[#allocation2 + $0x60] sm:$0xf]
    %v180 = vld [vmem:[#allocation2 + $0x64] sm:$0xf]
    %v181 = vld [vmem:[#allocation2 + $0x68] sm:$0xf]
    %v182 = vld [vmem:[#allocation2 + $0x6c] sm:$0xf]
    %v183 = vld [vmem:[#allocation2 + $0x70] sm:$0xf]
    %v184 = vld [vmem:[#allocation2 + $0x74] sm:$0xf]
    %v185 = vld [vmem:[#allocation2 + $0x78] sm:$0xf]
    %v186 = vld [vmem:[#allocation2 + $0x7c] sm:$0xf]
    %v187 = vld [vmem:[#allocation2 + $0x80] sm:$0xf]
    %v188 = vld [vmem:[#allocation2 + $0x84] sm:$0xf]
    %v189 = vld [vmem:[#allocation2 + $0x88] sm:$0xf]
    %v190 = vld [vmem:[#allocation2 + $0x8c] sm:$0xf]
    %v191 = vld [vmem:[#allocation2 + $0x90] sm:$0xf]
    %v192 = vld [vmem:[#allocation2 + $0x94] sm:$0xf]
    %v193 = vld [vmem:[#allocation2 + $0x98] sm:$0xf]
    %v194 = vld [vmem:[#allocation2 + $0x9c] sm:$0xf]
    %v195 = vld [vmem:[#allocation2 + $0xa0] sm:$0xf]
    %v196 = vld [vmem:[#allocation2 + $0xa4] sm:$0xf]
    %v197 = vld [vmem:[#allocation2 + $0xa8] sm:$0xf]
    %v198 = vld [vmem:[#allocation2 + $0xac] sm:$0xf]
    %v199 = vld [vmem:[#allocation2 + $0xb0] sm:$0xf]
    %v200 = vld [vmem:[#allocation2 + $0xb4] sm:$0xf]
    %v201 = vld [vmem:[#allocation2 + $0xb8] sm:$0xf]
    %v202 = vld [vmem:[#allocation2 + $0xbc] sm:$0xf]
    %v203 = vld [vmem:[#allocation2 + $0xc0] sm:$0xf]
    %v204 = vld [vmem:[#allocation2 + $0xc4] sm:$0xf]
    %v205 = vld [vmem:[#allocation2 + $0xc8] sm:$0xf]
    %v206 = vld [vmem:[#allocation2 + $0xcc] sm:$0xf]
    %v207 = vld [vmem:[#allocation2 + $0xd0] sm:$0xf]
    %v208 = vld [vmem:[#allocation2 + $0xd4] sm:$0xf]
    %v209 = vld [vmem:[#allocation2 + $0xd8] sm:$0xf]
    %v210 = vld [vmem:[#allocation2 + $0xdc] sm:$0xf]
    %v211 = vld [vmem:[#allocation2 + $0xe0] sm:$0xf]
    %v212 = vld [vmem:[#allocation2 + $0xe4] sm:$0xf]
    %v213 = vld [vmem:[#allocation2 + $0xe8] sm:$0xf]
    %v214 = vld [vmem:[#allocation2 + $0xec] sm:$0xf]
    %v215 = vld [vmem:[#allocation2 + $0xf0] sm:$0xf]
    %v216 = vld [vmem:[#allocation2 + $0xf4] sm:$0xf]
    %v217 = vld [vmem:[#allocation2 + $0xf8] sm:$0xf]
    %v218 = vld [vmem:[#allocation2 + $0xfc] sm:$0xf]
    %v219 = vld [vmem:[#allocation2 + $0x100] sm:$0xf]
    %v220 = vld [vmem:[#allocation2 + $0x104] sm:$0xf]
    %v221 = vld [vmem:[#allocation2 + $0x108] sm:$0xf]
    %v222 = vld [vmem:[#allocation2 + $0x10c] sm:$0xf]
    %v223 = vld [vmem:[#allocation2 + $0x110] sm:$0xf]
    %v224 = vld [vmem:[#allocation2 + $0x114] sm:$0xf]
    %v225 = vld [vmem:[#allocation2 + $0x118] sm:$0xf]
    %v226 = vld [vmem:[#allocation2 + $0x11c] sm:$0xf]
    %v227 = vld [vmem:[#allocation2 + $0x120] sm:$0xf]
    %v228 = vld [vmem:[#allocation2 + $0x124] sm:$0xf]
    %v229 = vld [vmem:[#allocation2 + $0x128] sm:$0xf]
    %v230 = vld [vmem:[#allocation2 + $0x12c] sm:$0xf]
    %v231 = vld [vmem:[#allocation2 + $0x130] sm:$0xf]
    %v232 = vld [vmem:[#allocation2 + $0x134] sm:$0xf]
    %v233 = vld [vmem:[#allocation2 + $0x138] sm:$0xf]
    %v234 = vld [vmem:[#allocation2 + $0x13c] sm:$0xf]
    %v235 = vld [vmem:[#allocation2 + $0x140] sm:$0xf]
    %v236 = vld [vmem:[#allocation2 + $0x144] sm:$0xf]
    %v237 = vld [vmem:[#allocation2 + $0x148] sm:$0xf]
    %v238 = vld [vmem:[#allocation2 + $0x14c] sm:$0xf]
    %v239 = vld [vmem:[#allocation2 + $0x150] sm:$0xf]
    %v240 = vld [vmem:[#allocation2 + $0x154] sm:$0xf]
    %v241 = vld [vmem:[#allocation2 + $0x158] sm:$0xf]
    %v242 = vld [vmem:[#allocation2 + $0x15c] sm:$0xf]
    %v243 = vld [vmem:[#allocation2 + $0x160] sm:$0xf]
    %v244 = vld [vmem:[#allocation2 + $0x164] sm:$0xf]
    %v245 = vld [vmem:[#allocation2 + $0x168] sm:$0xf]
    %v246 = vld [vmem:[#allocation2 + $0x16c] sm:$0xf]
    %v247 = vld [vmem:[#allocation2 + $0x170] sm:$0xf]
    %v248 = vld [vmem:[#allocation2 + $0x174] sm:$0xf]
    %v249 = vld [vmem:[#allocation2 + $0x178] sm:$0xf]
    %v250 = vld [vmem:[#allocation2 + $0x17c] sm:$0xf]
    %v251 = vld [vmem:[#allocation2 + $0x180] sm:$0xf]
    %v252 = vld [vmem:[#allocation2 + $0x184] sm:$0xf]
    %v253 = vld [vmem:[%s2] sm:$0x1]
    %v255 = vlaneseq
    %v256 = vshrl.u32 %v255, 7
    %v257 = vsub.s32 0, %v256
    %v258 = vrot.slane %v253, %v257
    %v358 = vunpack.c.l.b16 %v155
    %v359 = vunpack.c.l.b16 %v156
    %v360 = vunpack.c.l.b16 %v157
    %v361 = vunpack.c.l.b16 %v158
    %v362 = vunpack.c.l.b16 %v159
    %v363 = vunpack.c.l.b16 %v160
    %v364 = vunpack.c.l.b16 %v161
    %v365 = vunpack.c.l.b16 %v162
    %v366 = vunpack.c.l.b16 %v163
    %v367 = vunpack.c.l.b16 %v164
    %v368 = vunpack.c.l.b16 %v165
    %v369 = vunpack.c.l.b16 %v166
    %v370 = vunpack.c.l.b16 %v167
    %v371 = vunpack.c.l.b16 %v168
    %v372 = vunpack.c.l.b16 %v169
    %v373 = vunpack.c.l.b16 %v170
    %v374 = vunpack.c.l.b16 %v171
    %v375 = vunpack.c.l.b16 %v172
    %v376 = vunpack.c.l.b16 %v173
    %v377 = vunpack.c.l.b16 %v174
    %v378 = vunpack.c.l.b16 %v175
    %v379 = vunpack.c.l.b16 %v176
    %v380 = vunpack.c.l.b16 %v177
    %v381 = vunpack.c.l.b16 %v178
    %v382 = vunpack.c.l.b16 %v179
    %v383 = vunpack.c.l.b16 %v180
    %v384 = vunpack.c.l.b16 %v181
    %v385 = vunpack.c.l.b16 %v182
    %v386 = vunpack.c.l.b16 %v183
    %v387 = vunpack.c.l.b16 %v184
    %v388 = vunpack.c.l.b16 %v185
    %v389 = vunpack.c.l.b16 %v186
    %v390 = vunpack.c.l.b16 %v187
    %v391 = vunpack.c.l.b16 %v188
    %v392 = vunpack.c.l.b16 %v189
    %v393 = vunpack.c.l.b16 %v190
    %v394 = vunpack.c.l.b16 %v191
    %v395 = vunpack.c.l.b16 %v192
    %v396 = vunpack.c.l.b16 %v193
    %v397 = vunpack.c.l.b16 %v194
    %v398 = vunpack.c.l.b16 %v195
    %v399 = vunpack.c.l.b16 %v196
    %v400 = vunpack.c.l.b16 %v197
    %v401 = vunpack.c.l.b16 %v198
    %v402 = vunpack.c.l.b16 %v199
    %v403 = vunpack.c.l.b16 %v200
    %v404 = vunpack.c.l.b16 %v201
    %v405 = vunpack.c.l.b16 %v202
    %v406 = vunpack.c.l.b16 %v203
    %v407 = vunpack.c.l.b16 %v204
    %v408 = vunpack.c.l.b16 %v205
    %v409 = vunpack.c.l.b16 %v206
    %v410 = vunpack.c.l.b16 %v207
    %v411 = vunpack.c.l.b16 %v208
    %v412 = vunpack.c.l.b16 %v209
    %v413 = vunpack.c.l.b16 %v210
    %v414 = vunpack.c.l.b16 %v211
    %v415 = vunpack.c.l.b16 %v212
    %v416 = vunpack.c.l.b16 %v213
    %v417 = vunpack.c.l.b16 %v214
    %v418 = vunpack.c.l.b16 %v215
    %v419 = vunpack.c.l.b16 %v216
    %v420 = vunpack.c.l.b16 %v217
    %v421 = vunpack.c.l.b16 %v218
    %v422 = vunpack.c.l.b16 %v219
    %v423 = vunpack.c.l.b16 %v220
    %v424 = vunpack.c.l.b16 %v221
    %v425 = vunpack.c.l.b16 %v222
    %v426 = vunpack.c.l.b16 %v223
    %v427 = vunpack.c.l.b16 %v224
    %v428 = vunpack.c.l.b16 %v225
    %v429 = vunpack.c.l.b16 %v226
    %v430 = vunpack.c.l.b16 %v227
    %v431 = vunpack.c.l.b16 %v228
    %v432 = vunpack.c.l.b16 %v229
    %v433 = vunpack.c.l.b16 %v230
    %v434 = vunpack.c.l.b16 %v231
    %v435 = vunpack.c.l.b16 %v232
    %v436 = vunpack.c.l.b16 %v233
    %v437 = vunpack.c.l.b16 %v234
    %v438 = vunpack.c.l.b16 %v235
    %v439 = vunpack.c.l.b16 %v236
    %v440 = vunpack.c.l.b16 %v237
    %v441 = vunpack.c.l.b16 %v238
    %v442 = vunpack.c.l.b16 %v239
    %v443 = vunpack.c.l.b16 %v240
    %v444 = vunpack.c.l.b16 %v241
    %v445 = vunpack.c.l.b16 %v242
    %v446 = vunpack.c.l.b16 %v243
    %v447 = vunpack.c.l.b16 %v244
    %v448 = vunpack.c.l.b16 %v245
    %v449 = vunpack.c.l.b16 %v246
    %v450 = vunpack.c.l.b16 %v247
    %v451 = vunpack.c.l.b16 %v248
    %v452 = vunpack.c.l.b16 %v249
    %v453 = vunpack.c.l.b16 %v250
    %v454 = vunpack.c.l.b16 %v251
    %v455 = vunpack.c.l.b16 %v252
    %v456 = vpack.c.b16 %v359, %v358
    %v457 = vpack.c.b16 %v361, %v360
    %v458 = vpack.c.b16 %v363, %v362
    %v459 = vpack.c.b16 %v365, %v364
    %v460 = vpack.c.b16 %v367, %v366
    %v461 = vpack.c.b16 %v369, %v368
    %v462 = vpack.c.b16 %v371, %v370
    %v463 = vpack.c.b16 %v373, %v372
    %v464 = vpack.c.b16 %v375, %v374
    %v465 = vpack.c.b16 %v377, %v376
    %v466 = vpack.c.b16 %v379, %v378
    %v467 = vpack.c.b16 %v381, %v380
    %v468 = vpack.c.b16 %v383, %v382
    %v469 = vpack.c.b16 %v385, %v384
    %v470 = vpack.c.b16 %v387, %v386
    %v471 = vpack.c.b16 %v389, %v388
    %v472 = vpack.c.b16 %v391, %v390
    %v473 = vpack.c.b16 %v393, %v392
    %v474 = vpack.c.b16 %v395, %v394
    %v475 = vpack.c.b16 %v397, %v396
    %v476 = vpack.c.b16 %v399, %v398
    %v477 = vpack.c.b16 %v401, %v400
    %v478 = vpack.c.b16 %v403, %v402
    %v479 = vpack.c.b16 %v405, %v404
    %v480 = vpack.c.b16 %v407, %v406
    %v481 = vpack.c.b16 %v409, %v408
    %v482 = vpack.c.b16 %v411, %v410
    %v483 = vpack.c.b16 %v413, %v412
    %v484 = vpack.c.b16 %v415, %v414
    %v485 = vpack.c.b16 %v417, %v416
    %v486 = vpack.c.b16 %v419, %v418
    %v487 = vpack.c.b16 %v421, %v420
    %v488 = vpack.c.b16 %v423, %v422
    %v489 = vpack.c.b16 %v425, %v424
    %v490 = vpack.c.b16 %v427, %v426
    %v491 = vpack.c.b16 %v429, %v428
    %v492 = vpack.c.b16 %v431, %v430
    %v493 = vpack.c.b16 %v433, %v432
    %v494 = vpack.c.b16 %v435, %v434
    %v495 = vpack.c.b16 %v437, %v436
    %v496 = vpack.c.b16 %v439, %v438
    %v497 = vpack.c.b16 %v441, %v440
    %v498 = vpack.c.b16 %v443, %v442
    %v499 = vpack.c.b16 %v445, %v444
    %v500 = vpack.c.b16 %v447, %v446
    %v501 = vpack.c.b16 %v449, %v448
    %v502 = vpack.c.b16 %v451, %v450
    %v503 = vpack.c.b16 %v453, %v452
    %v504 = vpack.c.b16 %v455, %v454
    %vm554 = vcmask 130048
    %v556 = vsel %vm554, %v154, 0
    %558 = vmatprep.subr.bf16.mxu0 0
    %559 = vmatpush1.bf16.msra.mxu0 %v456
    %560 = vmatprep.subr.bf16.mxu0 0
    %561 = vmatpush1.bf16.msra.mxu0 %v457
    %562 = vmatprep.subr.bf16.mxu0 0
    %563 = vmatpush1.bf16.msra.mxu0 %v458
    %564 = vmatprep.subr.bf16.mxu0 0
    %565 = vmatpush1.bf16.msra.mxu0 %v459
    %566 = vmatprep.subr.bf16.mxu0 0
    %567 = vmatpush1.bf16.msra.mxu0 %v460
    %568 = vmatprep.subr.bf16.mxu0 0
    %569 = vmatpush1.bf16.msra.mxu0 %v461
    %570 = vmatprep.subr.bf16.mxu0 0
    %571 = vmatpush1.bf16.msra.mxu0 %v462
    %572 = vmatprep.subr.bf16.mxu0 0
    %573 = vmatpush1.bf16.msra.mxu0 %v463
    %574 = vmatprep.subr.bf16.mxu0 0
    %575 = vmatpush1.bf16.msra.mxu0 %v464
    %576 = vmatprep.subr.bf16.mxu0 0
    %577 = vmatpush1.bf16.msra.mxu0 %v465
    %578 = vmatprep.subr.bf16.mxu0 0
    %579 = vmatpush1.bf16.msra.mxu0 %v466
    %580 = vmatprep.subr.bf16.mxu0 0
    %581 = vmatpush1.bf16.msra.mxu0 %v467
    %582 = vmatprep.subr.bf16.mxu0 0
    %583 = vmatpush1.bf16.msra.mxu0 %v468
    %584 = vmatprep.subr.bf16.mxu0 0
    %585 = vmatpush1.bf16.msra.mxu0 %v469
    %586 = vmatprep.subr.bf16.mxu0 0
    %587 = vmatpush1.bf16.msra.mxu0 %v470
    %588 = vmatprep.subr.bf16.mxu0 0
    %589 = vmatpush1.bf16.msra.mxu0 %v471
    %590 = vmatprep.mubr.bf16.mxu0 %v149
    %591 = vmatmul.mubr.bf16.gmra.mrb[0].mxu0 %v148
    %v592 = vpop.f32.mrb[0].mxu0
    %v593 = vadd.f32 %v258, %v592
    %v594 = vpop.f32.mrb[0].mxu0
    %v595 = vpop.f32.mrb[0].mxu0
    %v596 = vpop.f32.mrb[0].mxu0
    %597 = vdwg.mxu0
    %598 = vmatprep.subr.bf16.mxu0 0
    %599 = vmatpush1.bf16.msra.mxu0 %v472
    %600 = vmatprep.subr.bf16.mxu0 0
    %601 = vmatpush1.bf16.msra.mxu0 %v473
    %602 = vmatprep.subr.bf16.mxu0 0
    %603 = vmatpush1.bf16.msra.mxu0 %v474
    %604 = vmatprep.subr.bf16.mxu0 0
    %605 = vmatpush1.bf16.msra.mxu0 %v475
    %606 = vmatprep.subr.bf16.mxu0 0
    %607 = vmatpush1.bf16.msra.mxu0 %v476
    %608 = vmatprep.subr.bf16.mxu0 0
    %609 = vmatpush1.bf16.msra.mxu0 %v477
    %610 = vmatprep.subr.bf16.mxu0 0
    %611 = vmatpush1.bf16.msra.mxu0 %v478
    %612 = vmatprep.subr.bf16.mxu0 0
    %613 = vmatpush1.bf16.msra.mxu0 %v479
    %614 = vmatprep.subr.bf16.mxu0 0
    %615 = vmatpush1.bf16.msra.mxu0 %v480
    %616 = vmatprep.subr.bf16.mxu0 0
    %617 = vmatpush1.bf16.msra.mxu0 %v481
    %618 = vmatprep.subr.bf16.mxu0 0
    %619 = vmatpush1.bf16.msra.mxu0 %v482
    %620 = vmatprep.subr.bf16.mxu0 0
    %621 = vmatpush1.bf16.msra.mxu0 %v483
    %622 = vmatprep.subr.bf16.mxu0 0
    %623 = vmatpush1.bf16.msra.mxu0 %v484
    %624 = vmatprep.subr.bf16.mxu0 0
    %625 = vmatpush1.bf16.msra.mxu0 %v485
    %626 = vmatprep.subr.bf16.mxu0 0
    %627 = vmatpush1.bf16.msra.mxu0 %v486
    %628 = vmatprep.subr.bf16.mxu0 0
    %629 = vmatpush1.bf16.msra.mxu0 %v487
    %630 = vmatprep.mubr.bf16.mxu0 %v151
    %631 = vmatmul.mubr.bf16.gmra.mrb[0].mxu0 %v150
    %v632 = vpop.f32.mrb[0].mxu0
    %v633 = vadd.f32 %v593, %v632
    %v634 = vpop.f32.mrb[0].mxu0
    %v635 = vpop.f32.mrb[0].mxu0
    %v636 = vpop.f32.mrb[0].mxu0
    %637 = vdwg.mxu0
    %638 = vmatprep.subr.bf16.mxu0 0
    %639 = vmatpush1.bf16.msra.mxu0 %v488
    %640 = vmatprep.subr.bf16.mxu0 0
    %641 = vmatpush1.bf16.msra.mxu0 %v489
    %642 = vmatprep.subr.bf16.mxu0 0
    %643 = vmatpush1.bf16.msra.mxu0 %v490
    %644 = vmatprep.subr.bf16.mxu0 0
    %645 = vmatpush1.bf16.msra.mxu0 %v491
    %646 = vmatprep.subr.bf16.mxu0 0
    %647 = vmatpush1.bf16.msra.mxu0 %v492
    %648 = vmatprep.subr.bf16.mxu0 0
    %649 = vmatpush1.bf16.msra.mxu0 %v493
    %650 = vmatprep.subr.bf16.mxu0 0
    %651 = vmatpush1.bf16.msra.mxu0 %v494
    %652 = vmatprep.subr.bf16.mxu0 0
    %653 = vmatpush1.bf16.msra.mxu0 %v495
    %654 = vmatprep.subr.bf16.mxu0 0
    %655 = vmatpush1.bf16.msra.mxu0 %v496
    %656 = vmatprep.subr.bf16.mxu0 0
    %657 = vmatpush1.bf16.msra.mxu0 %v497
    %658 = vmatprep.subr.bf16.mxu0 0
    %659 = vmatpush1.bf16.msra.mxu0 %v498
    %660 = vmatprep.subr.bf16.mxu0 0
    %661 = vmatpush1.bf16.msra.mxu0 %v499
    %662 = vmatprep.subr.bf16.mxu0 0
    %663 = vmatpush1.bf16.msra.mxu0 %v500
    %664 = vmatprep.subr.bf16.mxu0 0
    %665 = vmatpush1.bf16.msra.mxu0 %v501
    %666 = vmatprep.subr.bf16.mxu0 0
    %667 = vmatpush1.bf16.msra.mxu0 %v502
    %668 = vmatprep.subr.bf16.mxu0 0
    %669 = vmatpush1.bf16.msra.mxu0 %v503
    %670 = vmatprep.mubr.bf16.mxu0 %v153
    %671 = vmatmul.mubr.bf16.gmra.mrb[0].mxu0 %v152
    %v672 = vpop.f32.mrb[0].mxu0
    %v673 = vadd.f32 %v633, %v672
    %v674 = vpop.f32.mrb[0].mxu0
    %v675 = vpop.f32.mrb[0].mxu0
    %v676 = vpop.f32.mrb[0].mxu0
    %677 = vdwg.mxu0
    %678 = vmatprep.subr.bf16.mxu0 0
    %679 = vmatpush1.bf16.msra.mxu0 %v504
    %680 = vmatprep.subr.bf16.mxu0 0
    %681 = vmatpush1.bf16.msra.mxu0 0
    %682 = vmatprep.subr.bf16.mxu0 0
    %683 = vmatpush1.bf16.msra.mxu0 0
    %684 = vmatprep.subr.bf16.mxu0 0
    %685 = vmatpush1.bf16.msra.mxu0 0
    %686 = vmatprep.subr.bf16.mxu0 0
    %687 = vmatpush1.bf16.msra.mxu0 0
    %688 = vmatprep.subr.bf16.mxu0 0
    %689 = vmatpush1.bf16.msra.mxu0 0
    %690 = vmatprep.subr.bf16.mxu0 0
    %691 = vmatpush1.bf16.msra.mxu0 0
    %692 = vmatprep.subr.bf16.mxu0 0
    %693 = vmatpush1.bf16.msra.mxu0 0
    %694 = vmatprep.subr.bf16.mxu0 0
    %695 = vmatpush1.bf16.msra.mxu0 0
    %696 = vmatprep.subr.bf16.mxu0 0
    %697 = vmatpush1.bf16.msra.mxu0 0
    %698 = vmatprep.subr.bf16.mxu0 0
    %699 = vmatpush1.bf16.msra.mxu0 0
    %700 = vmatprep.subr.bf16.mxu0 0
    %701 = vmatpush1.bf16.msra.mxu0 0
    %702 = vmatprep.subr.bf16.mxu0 0
    %703 = vmatpush1.bf16.msra.mxu0 0
    %704 = vmatprep.subr.bf16.mxu0 0
    %705 = vmatpush1.bf16.msra.mxu0 0
    %706 = vmatprep.subr.bf16.mxu0 0
    %707 = vmatpush1.bf16.msra.mxu0 0
    %708 = vmatprep.subr.bf16.mxu0 0
    %709 = vmatpush1.bf16.msra.mxu0 0
    %710 = vmatprep.mubr.bf16.mxu0 0
    %711 = vmatmul.mubr.bf16.gmra.mrb[0].mxu0 %v556
    %v712 = vpop.f32.mrb[0].mxu0
    %v713 = vadd.f32 %v673, %v712
    %v714 = vpop.f32.mrb[0].mxu0
    %v715 = vpop.f32.mrb[0].mxu0
    %v716 = vpop.f32.mrb[0].mxu0
    %717 = vdwg.mxu0
    %v718 = vmax.f32 %v713, 0.0
    %v719 = vpack.c.bf16 %v718, %v718
    %v720 = vld [vmem:[%s3] sm:$0xf]
    %v721 = vld [vmem:[%s3 + $0x4] sm:$0xf]
    %v722 = vld [vmem:[%s3 + $0x8] sm:$0xf]
    %v723 = vld [vmem:[%s3 + $0xc] sm:$0xf]
    %v724 = vld [vmem:[%s3 + $0x10] sm:$0xf]
    %v725 = vld [vmem:[%s3 + $0x14] sm:$0xf]
    %v726 = vld [vmem:[%s3 + $0x18] sm:$0xf]
    %v727 = vld [vmem:[%s3 + $0x1c] sm:$0xf]
    %v728 = vld [vmem:[%s3 + $0x20] sm:$0xf]
    %v729 = vld [vmem:[%s3 + $0x24] sm:$0xf]
    %v730 = vld [vmem:[%s3 + $0x28] sm:$0xf]
    %v731 = vld [vmem:[%s3 + $0x2c] sm:$0xf]
    %v732 = vld [vmem:[%s3 + $0x30] sm:$0xf]
    %v733 = vld [vmem:[%s3 + $0x34] sm:$0xf]
    %v734 = vld [vmem:[%s3 + $0x38] sm:$0xf]
    %v735 = vld [vmem:[%s3 + $0x3c] sm:$0xf]
    %v736 = vld [vmem:[#allocation5] sm:$0x1]
    %v738 = vlaneseq
    %v739 = vshrl.u32 %v738, 7
    %v740 = vsub.s32 0, %v739
    %v741 = vrot.slane %v736, %v740
    %v759 = vunpack.c.l.b16 %v720
    %v760 = vunpack.c.l.b16 %v721
    %v761 = vunpack.c.l.b16 %v722
    %v762 = vunpack.c.l.b16 %v723
    %v763 = vunpack.c.l.b16 %v724
    %v764 = vunpack.c.l.b16 %v725
    %v765 = vunpack.c.l.b16 %v726
    %v766 = vunpack.c.l.b16 %v727
    %v767 = vunpack.c.l.b16 %v728
    %v768 = vunpack.c.l.b16 %v729
    %v769 = vunpack.c.l.b16 %v730
    %v770 = vunpack.c.l.b16 %v731
    %v771 = vunpack.c.l.b16 %v732
    %v772 = vunpack.c.l.b16 %v733
    %v773 = vunpack.c.l.b16 %v734
    %v774 = vunpack.c.l.b16 %v735
    %v775 = vpack.c.b16 %v760, %v759
    %v776 = vpack.c.b16 %v762, %v761
    %v777 = vpack.c.b16 %v764, %v763
    %v778 = vpack.c.b16 %v766, %v765
    %v779 = vpack.c.b16 %v768, %v767
    %v780 = vpack.c.b16 %v770, %v769
    %v781 = vpack.c.b16 %v772, %v771
    %v782 = vpack.c.b16 %v774, %v773
    %791 = vmatprep.subr.bf16.mxu0 0
    %792 = vmatpush1.bf16.msra.mxu0 %v775
    %793 = vmatprep.subr.bf16.mxu0 0
    %794 = vmatpush1.bf16.msra.mxu0 %v776
    %795 = vmatprep.subr.bf16.mxu0 0
    %796 = vmatpush1.bf16.msra.mxu0 %v777
    %797 = vmatprep.subr.bf16.mxu0 0
    %798 = vmatpush1.bf16.msra.mxu0 %v778
    %799 = vmatprep.subr.bf16.mxu0 0
    %800 = vmatpush1.bf16.msra.mxu0 %v779
    %801 = vmatprep.subr.bf16.mxu0 0
    %802 = vmatpush1.bf16.msra.mxu0 %v780
    %803 = vmatprep.subr.bf16.mxu0 0
    %804 = vmatpush1.bf16.msra.mxu0 %v781
    %805 = vmatprep.subr.bf16.mxu0 0
    %806 = vmatpush1.bf16.msra.mxu0 %v782
    %807 = vmatprep.subr.bf16.mxu0 0
    %808 = vmatpush1.bf16.msra.mxu0 0
    %809 = vmatprep.subr.bf16.mxu0 0
    %810 = vmatpush1.bf16.msra.mxu0 0
    %811 = vmatprep.subr.bf16.mxu0 0
    %812 = vmatpush1.bf16.msra.mxu0 0
    %813 = vmatprep.subr.bf16.mxu0 0
    %814 = vmatpush1.bf16.msra.mxu0 0
    %815 = vmatprep.subr.bf16.mxu0 0
    %816 = vmatpush1.bf16.msra.mxu0 0
    %817 = vmatprep.subr.bf16.mxu0 0
    %818 = vmatpush1.bf16.msra.mxu0 0
    %819 = vmatprep.subr.bf16.mxu0 0
    %820 = vmatpush1.bf16.msra.mxu0 0
    %821 = vmatprep.subr.bf16.mxu0 0
    %822 = vmatpush1.bf16.msra.mxu0 0
    %823 = vmatprep.mubr.bf16.mxu0 0
    %824 = vmatmul.mubr.bf16.gmra.mrb[0].mxu0 %v719
    %v825 = vpop.f32.mrb[0].mxu0
    %v826 = vadd.f32 %v741, %v825
    %v827 = vpop.f32.mrb[0].mxu0
    %v828 = vpop.f32.mrb[0].mxu0
    %v829 = vpop.f32.mrb[0].mxu0
    %830 = vdwg.mxu0
    %v831 = vmax.f32 %v826, 0.0
    %v832 = vpack.c.bf16 %v831, %v831
    %v833 = vld [vmem:[%s5] sm:$0xf]
    %v834 = vld [vmem:[%s5 + $0x4] sm:$0xf]
    %v835 = vld [vmem:[%s5 + $0x8] sm:$0xf]
    %v836 = vld [vmem:[%s5 + $0xc] sm:$0xf]
    %v837 = vld [vmem:[%s5 + $0x10] sm:$0xf]
    %v838 = vld [vmem:[%s5 + $0x14] sm:$0xf]
    %v839 = vld [vmem:[%s5 + $0x18] sm:$0xf]
    %v840 = vld [vmem:[%s5 + $0x1c] sm:$0xf]
    %v841 = vld [vmem:[%s5 + $0x20] sm:$0xf]
    %v842 = vld [vmem:[%s5 + $0x24] sm:$0xf]
    %v843 = vld [vmem:[%s5 + $0x28] sm:$0xf]
    %v844 = vld [vmem:[%s5 + $0x2c] sm:$0xf]
    %v845 = vld [vmem:[%s5 + $0x30] sm:$0xf]
    %v846 = vld [vmem:[%s5 + $0x34] sm:$0xf]
    %v847 = vld [vmem:[%s5 + $0x38] sm:$0xf]
    %v848 = vld [vmem:[%s5 + $0x3c] sm:$0xf]
    %v849 = vld [vmem:[%s6] sm:$0x1]
    %v851 = vlaneseq
    %v852 = vshrl.u32 %v851, 7
    %v853 = vsub.s32 0, %v852
    %v854 = vrot.slane %v849, %v853
    %v872 = vunpack.c.l.b16 %v833
    %v873 = vunpack.c.l.b16 %v834
    %v874 = vunpack.c.l.b16 %v835
    %v875 = vunpack.c.l.b16 %v836
    %v876 = vunpack.c.l.b16 %v837
    %v877 = vunpack.c.l.b16 %v838
    %v878 = vunpack.c.l.b16 %v839
    %v879 = vunpack.c.l.b16 %v840
    %v880 = vunpack.c.l.b16 %v841
    %v881 = vunpack.c.l.b16 %v842
    %v882 = vunpack.c.l.b16 %v843
    %v883 = vunpack.c.l.b16 %v844
    %v884 = vunpack.c.l.b16 %v845
    %v885 = vunpack.c.l.b16 %v846
    %v886 = vunpack.c.l.b16 %v847
    %v887 = vunpack.c.l.b16 %v848
    %v888 = vpack.c.b16 %v873, %v872
    %v889 = vpack.c.b16 %v875, %v874
    %v890 = vpack.c.b16 %v877, %v876
    %v891 = vpack.c.b16 %v879, %v878
    %v892 = vpack.c.b16 %v881, %v880
    %v893 = vpack.c.b16 %v883, %v882
    %v894 = vpack.c.b16 %v885, %v884
    %v895 = vpack.c.b16 %v887, %v886
    %904 = vmatprep.subr.bf16.mxu0 0
    %905 = vmatpush1.bf16.msra.mxu0 %v888
    %906 = vmatprep.subr.bf16.mxu0 0
    %907 = vmatpush1.bf16.msra.mxu0 %v889
    %908 = vmatprep.subr.bf16.mxu0 0
    %909 = vmatpush1.bf16.msra.mxu0 %v890
    %910 = vmatprep.subr.bf16.mxu0 0
    %911 = vmatpush1.bf16.msra.mxu0 %v891
    %912 = vmatprep.subr.bf16.mxu0 0
    %913 = vmatpush1.bf16.msra.mxu0 %v892
    %914 = vmatprep.subr.bf16.mxu0 0
    %915 = vmatpush1.bf16.msra.mxu0 %v893
    %916 = vmatprep.subr.bf16.mxu0 0
    %917 = vmatpush1.bf16.msra.mxu0 %v894
    %918 = vmatprep.subr.bf16.mxu0 0
    %919 = vmatpush1.bf16.msra.mxu0 %v895
    %920 = vmatprep.subr.bf16.mxu0 0
    %921 = vmatpush1.bf16.msra.mxu0 0
    %922 = vmatprep.subr.bf16.mxu0 0
    %923 = vmatpush1.bf16.msra.mxu0 0
    %924 = vmatprep.subr.bf16.mxu0 0
    %925 = vmatpush1.bf16.msra.mxu0 0
    %926 = vmatprep.subr.bf16.mxu0 0
    %927 = vmatpush1.bf16.msra.mxu0 0
    %928 = vmatprep.subr.bf16.mxu0 0
    %929 = vmatpush1.bf16.msra.mxu0 0
    %930 = vmatprep.subr.bf16.mxu0 0
    %931 = vmatpush1.bf16.msra.mxu0 0
    %932 = vmatprep.subr.bf16.mxu0 0
    %933 = vmatpush1.bf16.msra.mxu0 0
    %934 = vmatprep.subr.bf16.mxu0 0
    %935 = vmatpush1.bf16.msra.mxu0 0
    %936 = vmatprep.mubr.bf16.mxu0 0
    %937 = vmatmul.mubr.bf16.gmra.mrb[0].mxu0 %v832
    %v938 = vpop.f32.mrb[0].mxu0
    %v939 = vadd.f32 %v854, %v938
    %v940 = vpop.f32.mrb[0].mxu0
    %v941 = vpop.f32.mrb[0].mxu0
    %v942 = vpop.f32.mrb[0].mxu0
    %943 = vdwg.mxu0
    %944 = vst.msk [vmem:[#allocation7] sm:$0xff] %vm554, %v939
    // Predicated region
    $region38: #{tpu_custom_call.1} parent=1 // pred_check
      _
    $region39: #{tpu_custom_call.1} parent=1 // pred_check_branch
      %946 = sbr.rel (0) target = $region41
    $region40: #{tpu_custom_call.1} parent=1 // pred_region
      %s948 = ssub.s32 128, 32
      %949 = vsyncadd [#allocation4], %s948
      %s950 = sshll.u32 [#allocation7], 4
      %s951 = int_to_ptr.vmem [resolvable:$true] %s950
      %956 = dma.vmem_to_hbm [thread:$0]  %s951, 32, %s7, [#allocation4], 32, 32, 2
    $region41: #{tpu_custom_call.1} parent=1 // pred_fallthru
      _
    // Predicated region
    $region42: #{tpu_custom_call.1} parent=1 // pred_check
      _
    $region43: #{tpu_custom_call.1} parent=1 // pred_check_branch
      %958 = sbr.rel (0) target = $region45
    $region44: #{tpu_custom_call.1} parent=1 // pred_region
      %959 = dma.done [#allocation4], 128
    $region45: #{tpu_custom_call.1} parent=1 // pred_fallthru
      _
    %960 = vsyncpa [#allocation3], 1
    %961 = vsyncpa [#allocation6], 1
    %962 = vsyncpa [#allocation4], 1

</llo_original>
